<compile_context>
chip_gen: v7x
topology: tpu7x:2x2x1
jax: 0.10.0
libtpu: 0.0.40
codegen_flags: <defaults>
</compile_context>

<pallas_src>
import functools

import jax
import jax.numpy as jnp
import numpy as np
from jax.experimental import pallas as pl
from jax.experimental.pallas import tpu as pltpu


# ----------------------------------------------------------------------------
# Fused kernel:
#   x:    (N, D)       f32   (N = B*F, unpadded logical shape; cast to bf16 in-kernel)
#   w1:   (D, feat)    bf16  (backbone surrogate weight, prepared offline)
#   b1:   (1, feat)    f32
#   pool: (Bpad, N)    f32   (static {0,1} frame->video pooling matrix, rows >= B are 0)
#   wc:   (1, feat)    f32   (classifier weight, lane-dense row layout)
#   bc:   (1,)         f32   (classifier bias, SMEM scalar)
# outputs:
#   emb:        (Bpad, feat) f32   video embeddings (rows >= B are 0; slice outside)
#   logit_wide: (Bpad, 128)  f32   logit broadcast across 128 lanes (slice col 0 outside)
# ----------------------------------------------------------------------------
def _fused_kernel(x_ref, w1_ref, b1_ref, pool_ref, wc_ref, bc_ref,
                  emb_ref, logit_ref, *, inv_frames):
    # 1) frame features: relu(x @ w1 + b1).
    #    x is cast to bf16 in-register (MXU-native operand, no wrapper-side pass
    #    over x); accumulation stays f32; bias/ReLU on the f32 accumulator (VPU).
    x_bf16 = x_ref[...].astype(jnp.bfloat16)
    ff = jnp.dot(x_bf16, w1_ref[...], preferred_element_type=jnp.float32)
    ff = jnp.maximum(ff + b1_ref[...], 0.0)                       # (N, feat) f32

    # 2) temporal mean over frames: static {0,1} pooling matmul, then an exact
    #    post-matmul f32 scale by 1/num_frames (1/F is not exactly representable
    #    in low precision, so it is kept out of the matmul operands).
    emb = jnp.dot(pool_ref[...], ff,
                  preferred_element_type=jnp.float32) * inv_frames  # (Bpad, feat)
    emb_ref[...] = emb                                # dense, unmasked sublane store

    # 3) classifier head on VPU/XLU: elementwise mul + lane reduce (no 1-wide MXU
    #    matmul), bias scalar from SMEM, lane-dense broadcast store.
    logit = jnp.sum(emb * wc_ref[...], axis=-1, keepdims=True) + bc_ref[0]  # (Bpad, 1)
    logit_ref[...] = jnp.broadcast_to(logit, logit_ref.shape)


def _fused_forward(x_flat, w1, b1, pool, wc, bc, *, frames):
    n, d = x_flat.shape
    feat = w1.shape[1]
    b_pad = pool.shape[0]

    # Advisory cost hint for XLA's scheduler around the custom call.
    flops = 2 * n * d * feat + 2 * b_pad * n * feat + 2 * b_pad * feat
    bytes_accessed = (x_flat.size * 4 + w1.size * 2 + b1.size * 4 +
                      pool.size * 4 + wc.size * 4 + 4 +
                      b_pad * feat * 4 + b_pad * 128 * 4)

    kernel = functools.partial(_fused_kernel, inv_frames=float(1.0 / frames))
    return pl.pallas_call(
        kernel,
        out_shape=(
            jax.ShapeDtypeStruct((b_pad, feat), jnp.float32),
            jax.ShapeDtypeStruct((b_pad, 128), jnp.float32),
        ),
        in_specs=[
            pl.BlockSpec(memory_space=pltpu.MemorySpace.VMEM),   # x_flat (f32)
            pl.BlockSpec(memory_space=pltpu.MemorySpace.VMEM),   # w1 (bf16)
            pl.BlockSpec(memory_space=pltpu.MemorySpace.VMEM),   # b1
            pl.BlockSpec(memory_space=pltpu.MemorySpace.VMEM),   # pool
            pl.BlockSpec(memory_space=pltpu.MemorySpace.VMEM),   # wc
            pl.BlockSpec(memory_space=pltpu.MemorySpace.SMEM),   # bc (scalar)
        ],
        out_specs=(
            pl.BlockSpec(memory_space=pltpu.MemorySpace.VMEM),
            pl.BlockSpec(memory_space=pltpu.MemorySpace.VMEM),
        ),
        cost_estimate=pl.CostEstimate(
            flops=flops, transcendentals=0, bytes_accessed=bytes_accessed),
    )(x_flat, w1, b1, pool, wc, bc)


# ----------------------------------------------------------------------------
# One-time parameter preparation (done once at model-load time in production):
#   - backbone weight cast to bf16 (MXU operand dtype, halves weight DMA)
#   - static {0,1} pooling matrix for the temporal mean, padded to 8 sublanes
# ----------------------------------------------------------------------------
def prepare_params(params, *, batch, frames):
    n = batch * frames
    b_pad = ((batch + 7) // 8) * 8
    pool = np.zeros((b_pad, n), np.float32)
    for b in range(batch):
        pool[b, b * frames:(b + 1) * frames] = 1.0
    return {
        "w1": params["w1"].astype(jnp.bfloat16),
        "b1": params["b1"].astype(jnp.float32),                    # (1, feat)
        "pool": jnp.asarray(pool),                                 # (Bpad, N)
        "wc": params["w_cls"].reshape(1, -1).astype(jnp.float32),  # (1, feat)
        "bc": params["b_cls"].reshape(1).astype(jnp.float32),      # (1,) SMEM
    }


# ----------------------------------------------------------------------------
# Wrapper: SkeletonBasedDetector.forward (enable_multitask=False)
# Returns {'logits': (B,), 'embeddings': (B, feature_dim)}
# ----------------------------------------------------------------------------
@jax.jit
def skeleton_detector_forward(x, prep):
    b, f, c, h, w = x.shape
    x_flat = x.reshape(b * f, c * h * w)        # free metadata reshape, stays f32
    emb_pad, logit_wide = _fused_forward(
        x_flat, prep["w1"], prep["b1"], prep["pool"], prep["wc"], prep["bc"],
        frames=f)
    return {"logits": logit_wide[:b, 0], "embeddings": emb_pad[:b]}


def init_params(key, d, feature_dim):
    k1, k2 = jax.random.split(key, 2)
    return {
        "w1": jax.random.normal(k1, (d, feature_dim), jnp.float32) * 0.02,
        "b1": jnp.zeros((1, feature_dim), jnp.float32),
        "w_cls": jax.random.normal(k2, (feature_dim, 1), jnp.float32) * 0.02,
        "b_cls": jnp.zeros((1, 1), jnp.float32),
    }


def _reference_forward(x, params):
    """Pure-JAX f32 reference of the surrogate forward (for a sanity check)."""
    b, f, c, h, w = x.shape
    d = c * h * w
    x_flat = x.reshape(b * f, d).astype(jnp.float32)
    ff = jnp.maximum(x_flat @ params["w1"] + params["b1"], 0.0)
    emb = jnp.mean(ff.reshape(b, f, -1), axis=1)
    logits = (emb @ params["w_cls"] + params["b_cls"])[:, 0]
    return {"logits": logits, "embeddings": emb}


if __name__ == "__main__":
    # Small shapes consistent with the module's forward:
    # x: (batch=2, num_frames=5, C=3, H=16, W=16), feature_dim=128 (surrogate).
    B, F, C, H, W = 2, 5, 3, 16, 16
    FEATURE_DIM = 128

    key = jax.random.PRNGKey(0)
    kx, kp = jax.random.split(key)
    x = jax.random.normal(kx, (B, F, C, H, W), jnp.float32)
    params = init_params(kp, C * H * W, FEATURE_DIM)
    prep = prepare_params(params, batch=B, frames=F)   # one-time param prep

    out = skeleton_detector_forward(x, prep)
    jax.block_until_ready(out)

    assert out["logits"].shape == (B,)
    assert out["embeddings"].shape == (B, FEATURE_DIM)

    # Numerical sanity check against a pure-JAX f32 reference
    # (loose tolerance: kernel uses bf16 operands for the big matmul).
    ref = _reference_forward(x, params)
    np.testing.assert_allclose(
        np.asarray(out["embeddings"]), np.asarray(ref["embeddings"]),
        rtol=5e-2, atol=5e-2)
    np.testing.assert_allclose(
        np.asarray(out["logits"]), np.asarray(ref["logits"]),
        rtol=5e-2, atol=5e-2)

    print("KERNEL_OK")
</pallas_src>

<mosaic_0001>
module attributes {stable_mosaic.version = 11 : i64} {
  func.func @_fused_kernel(%arg0: memref<10x768xf32, #tpu.memory_space<vmem>>, %arg1: memref<768x128xbf16, #tpu.memory_space<vmem>>, %arg2: memref<1x128xf32, #tpu.memory_space<vmem>>, %arg3: memref<8x10xf32, #tpu.memory_space<vmem>>, %arg4: memref<1x128xf32, #tpu.memory_space<vmem>>, %arg5: memref<1xf32, #tpu.memory_space<smem>>, %arg6: memref<8x128xf32, #tpu.memory_space<vmem>>, %arg7: memref<8x128xf32, #tpu.memory_space<vmem>>) attributes {dimension_semantics = [], scalar_prefetch = 0 : i64, scratch_operands = 0 : i64, tpu.core_type = #tpu.core_type<tc>} {
    %c0 = arith.constant 0 : index
    %c0_0 = arith.constant 0 : index
    %0 = vector.load %arg0[%c0, %c0_0] : memref<10x768xf32, #tpu.memory_space<vmem>>, vector<10x768xf32>
    %1 = arith.truncf %0 : vector<10x768xf32> to vector<10x768xbf16>
    %c0_1 = arith.constant 0 : index
    %c0_2 = arith.constant 0 : index
    %2 = vector.load %arg1[%c0_1, %c0_2] : memref<768x128xbf16, #tpu.memory_space<vmem>>, vector<768x128xbf16>
    %cst = arith.constant dense<0.000000e+00> : vector<10x128xf32>
    %3 = tpu.matmul %1, %2, %cst {dimension_numbers = #tpu.dot_dimension_numbers<[1], [0], [0], [1], [0, 0, 1, 1], [], []>} : vector<10x768xbf16>, vector<768x128xbf16>, vector<10x128xf32> -> vector<10x128xf32>
    %c0_3 = arith.constant 0 : index
    %c0_4 = arith.constant 0 : index
    %4 = vector.load %arg2[%c0_3, %c0_4] : memref<1x128xf32, #tpu.memory_space<vmem>>, vector<1x128xf32>
    %5 = vector.broadcast %4 : vector<1x128xf32> to vector<10x128xf32>
    %6 = arith.addf %3, %5 : vector<10x128xf32>
    %cst_5 = arith.constant 0.000000e+00 : f32
    %7 = vector.broadcast %cst_5 : f32 to vector<10x128xf32>
    %8 = arith.maximumf %6, %7 : vector<10x128xf32>
    %c0_6 = arith.constant 0 : index
    %c0_7 = arith.constant 0 : index
    %9 = vector.load %arg3[%c0_6, %c0_7] : memref<8x10xf32, #tpu.memory_space<vmem>>, vector<8x10xf32>
    %cst_8 = arith.constant dense<0.000000e+00> : vector<8x128xf32>
    %10 = tpu.matmul %9, %8, %cst_8 {dimension_numbers = #tpu.dot_dimension_numbers<[1], [0], [0], [1], [0, 0, 1, 1], [], []>} : vector<8x10xf32>, vector<10x128xf32>, vector<8x128xf32> -> vector<8x128xf32>
    %cst_9 = arith.constant 2.000000e-01 : f32
    %11 = vector.broadcast %cst_9 : f32 to vector<8x128xf32>
    %12 = arith.mulf %10, %11 : vector<8x128xf32>
    %c0_10 = arith.constant 0 : index
    %c0_11 = arith.constant 0 : index
    %13 = vector.load %arg6[%c0_10, %c0_11] : memref<8x128xf32, #tpu.memory_space<vmem>>, vector<8x128xf32>
    tpu.vector_store %arg6[%c0_10, %c0_11], %12 {strides = array<i32>} : memref<8x128xf32, #tpu.memory_space<vmem>>, vector<8x128xf32>,
    %c0_12 = arith.constant 0 : index
    %c0_13 = arith.constant 0 : index
    %14 = vector.load %arg4[%c0_12, %c0_13] : memref<1x128xf32, #tpu.memory_space<vmem>>, vector<1x128xf32>
    %15 = vector.broadcast %14 : vector<1x128xf32> to vector<8x128xf32>
    %16 = arith.mulf %12, %15 : vector<8x128xf32>
    %cst_14 = arith.constant dense<0.000000e+00> : vector<8xf32>
    %17 = vector.multi_reduction <add>, %16, %cst_14 [1] : vector<8x128xf32> to vector<8xf32>
    %18 = vector.shape_cast %17 : vector<8xf32> to vector<8x1xf32>
    %c0_15 = arith.constant 0 : index
    %19 = memref.load %arg5[%c0_15] : memref<1xf32, #tpu.memory_space<smem>>
    %20 = vector.broadcast %19 : f32 to vector<8x1xf32>
    %21 = arith.addf %18, %20 : vector<8x1xf32>
    %22 = vector.shape_cast %21 : vector<8x1xf32> to vector<8x1xf32>
    %23 = vector.broadcast %22 : vector<8x1xf32> to vector<8x128xf32>
    %c0_16 = arith.constant 0 : index
    %c0_17 = arith.constant 0 : index
    %24 = vector.load %arg7[%c0_16, %c0_17] : memref<8x128xf32, #tpu.memory_space<vmem>>, vector<8x128xf32>
    tpu.vector_store %arg7[%c0_16, %c0_17], %23 {strides = array<i32>} : memref<8x128xf32, #tpu.memory_space<vmem>>, vector<8x128xf32>,
    return
  }
}

</mosaic_0001>

<llo_original>
// kernel: skeleton_detector_forward.1
$region0: #{skeleton_detector_forward.1}
  #allocation0 [shape = 'u32[]', space=smem, size = 0x4, offset = 0x4, fixed_abs, tag = 'smem constant byte address 0x4 - core index']
  #allocation1 [shape = 'u32[144,128]{1,0:T(1,128)}', space=vmem, size = 0x12000, scoped, tag = 'internal scratch']
  #allocation2 [shape = 'f32[1]{0:T(128)S(6)}', space=smem, size = 0x200, scoped, tag = 'scoped memory for skeleton_detector_forward.1']
  %s0 = inlined_call_operand.vmem [shape: f32[10,768], index: 0, kind: input, shape index: {}]
  %s1 = inlined_call_operand.vmem [shape: bf16[768,128], index: 1, kind: input, shape index: {}]
  %s2 = inlined_call_operand.vmem [shape: f32[1,128], index: 2, kind: input, shape index: {}]
  %s3 = inlined_call_operand.vmem [shape: f32[8,10], index: 3, kind: input, shape index: {}]
  %s4 = inlined_call_operand.vmem [shape: f32[1,128], index: 4, kind: input, shape index: {}]
  %s5 = inlined_call_operand.<no memory space> [shape: f32[1], index: 5, kind: input, shape index: {}]
  %s6 = inlined_call_operand.vmem [shape: f32[8,128], index: 6, kind: output, shape index: {0}]
  %s7 = inlined_call_operand.vmem [shape: f32[8,128], index: 7, kind: output, shape index: {1}]
  %8 = xla_tuple %s6, %s7
  %s9 = sld [smem:[#allocation0]]
  $region42: #{skeleton_detector_forward.1} parent=0
    _
  %s11 = ssub.s32 1, %s9
  %s12 = scalar_select 0, %s11, %s9
  %13 = sst [smem:[#allocation2]] %s5
  // Predicated region
  $region2: #{skeleton_detector_forward.1} parent=0 // pred_check
    _
  $region3: #{skeleton_detector_forward.1} parent=0 // pred_check_branch
    %15 = sbr.rel (0) target = $region5
  $region4: #{skeleton_detector_forward.1} parent=0 // pred_region
    _
  $region5: #{skeleton_detector_forward.1} parent=0 // pred_fallthru
    _
  // Predicated region
  $region6: #{skeleton_detector_forward.1} parent=0 // pred_check
    _
  $region7: #{skeleton_detector_forward.1} parent=0 // pred_check_branch
    %17 = sbr.rel (0) target = $region9
  $region8: #{skeleton_detector_forward.1} parent=0 // pred_region
    _
  $region9: #{skeleton_detector_forward.1} parent=0 // pred_fallthru
    _
  // Predicated region
  $region10: #{skeleton_detector_forward.1} parent=0 // pred_check
    _
  $region11: #{skeleton_detector_forward.1} parent=0 // pred_check_branch
    %19 = sbr.rel (0) target = $region13
  $region12: #{skeleton_detector_forward.1} parent=0 // pred_region
    _
  $region13: #{skeleton_detector_forward.1} parent=0 // pred_fallthru
    _
  // Predicated region
  $region14: #{skeleton_detector_forward.1} parent=0 // pred_check
    _
  $region15: #{skeleton_detector_forward.1} parent=0 // pred_check_branch
    %21 = sbr.rel (0) target = $region17
  $region16: #{skeleton_detector_forward.1} parent=0 // pred_region
    _
  $region17: #{skeleton_detector_forward.1} parent=0 // pred_fallthru
    _
  // Predicated region
  $region18: #{skeleton_detector_forward.1} parent=0 // pred_check
    _
  $region19: #{skeleton_detector_forward.1} parent=0 // pred_check_branch
    %23 = sbr.rel (0) target = $region21
  $region20: #{skeleton_detector_forward.1} parent=0 // pred_region
    _
  $region21: #{skeleton_detector_forward.1} parent=0 // pred_fallthru
    _
  // Predicated region
  $region22: #{skeleton_detector_forward.1} parent=0 // pred_check
    _
  $region23: #{skeleton_detector_forward.1} parent=0 // pred_check_branch
    %25 = sbr.rel (0) target = $region25
  $region24: #{skeleton_detector_forward.1} parent=0 // pred_region
    _
  $region25: #{skeleton_detector_forward.1} parent=0 // pred_fallthru
    _
  %v27 = vld [vmem:[%s0] sm:$0xff]
  %v28 = vld [vmem:[%s0 + $0x8] sm:$0xff]
  %v29 = vld [vmem:[%s0 + $0x10] sm:$0xff]
  %v30 = vld [vmem:[%s0 + $0x18] sm:$0xff]
  %v31 = vld [vmem:[%s0 + $0x20] sm:$0xff]
  %v32 = vld [vmem:[%s0 + $0x28] sm:$0xff]
  %v33 = vld [vmem:[%s0 + $0x30] sm:$0x3]
  %v34 = vld [vmem:[%s0 + $0x38] sm:$0x3]
  %v35 = vld [vmem:[%s0 + $0x40] sm:$0x3]
  %v36 = vld [vmem:[%s0 + $0x48] sm:$0x3]
  %v37 = vld [vmem:[%s0 + $0x50] sm:$0x3]
  %v38 = vld [vmem:[%s0 + $0x58] sm:$0x3]
  %v39 = vpack.c.bf16 %v33, %v27
  %v40 = vpack.c.bf16 %v34, %v28
  %v41 = vpack.c.bf16 %v35, %v29
  %v42 = vpack.c.bf16 %v36, %v30
  %v43 = vpack.c.bf16 %v37, %v31
  %v44 = vpack.c.bf16 %v38, %v32
  %v45 = vld [vmem:[%s1] sm:$0xf]
  %v46 = vld [vmem:[%s1 + $0x4] sm:$0xf]
  %v47 = vld [vmem:[%s1 + $0x8] sm:$0xf]
  %v48 = vld [vmem:[%s1 + $0xc] sm:$0xf]
  %v49 = vld [vmem:[%s1 + $0x10] sm:$0xf]
  %v50 = vld [vmem:[%s1 + $0x14] sm:$0xf]
  %v51 = vld [vmem:[%s1 + $0x18] sm:$0xf]
  %v52 = vld [vmem:[%s1 + $0x1c] sm:$0xf]
  %v53 = vld [vmem:[%s1 + $0x20] sm:$0xf]
  %v54 = vld [vmem:[%s1 + $0x24] sm:$0xf]
  %v55 = vld [vmem:[%s1 + $0x28] sm:$0xf]
  %v56 = vld [vmem:[%s1 + $0x2c] sm:$0xf]
  %v57 = vld [vmem:[%s1 + $0x30] sm:$0xf]
  %v58 = vld [vmem:[%s1 + $0x34] sm:$0xf]
  %v59 = vld [vmem:[%s1 + $0x38] sm:$0xf]
  %v60 = vld [vmem:[%s1 + $0x3c] sm:$0xf]
  %v61 = vld [vmem:[%s1 + $0x40] sm:$0xf]
  %v62 = vld [vmem:[%s1 + $0x44] sm:$0xf]
  %v63 = vld [vmem:[%s1 + $0x48] sm:$0xf]
  %v64 = vld [vmem:[%s1 + $0x4c] sm:$0xf]
  %v65 = vld [vmem:[%s1 + $0x50] sm:$0xf]
  %v66 = vld [vmem:[%s1 + $0x54] sm:$0xf]
  %v67 = vld [vmem:[%s1 + $0x58] sm:$0xf]
  %v68 = vld [vmem:[%s1 + $0x5c] sm:$0xf]
  %v69 = vld [vmem:[%s1 + $0x60] sm:$0xf]
  %v70 = vld [vmem:[%s1 + $0x64] sm:$0xf]
  %v71 = vld [vmem:[%s1 + $0x68] sm:$0xf]
  %v72 = vld [vmem:[%s1 + $0x6c] sm:$0xf]
  %v73 = vld [vmem:[%s1 + $0x70] sm:$0xf]
  %v74 = vld [vmem:[%s1 + $0x74] sm:$0xf]
  %v75 = vld [vmem:[%s1 + $0x78] sm:$0xf]
  %v76 = vld [vmem:[%s1 + $0x7c] sm:$0xf]
  %v77 = vld [vmem:[%s1 + $0x80] sm:$0xf]
  %v78 = vld [vmem:[%s1 + $0x84] sm:$0xf]
  %v79 = vld [vmem:[%s1 + $0x88] sm:$0xf]
  %v80 = vld [vmem:[%s1 + $0x8c] sm:$0xf]
  %v81 = vld [vmem:[%s1 + $0x90] sm:$0xf]
  %v82 = vld [vmem:[%s1 + $0x94] sm:$0xf]
  %v83 = vld [vmem:[%s1 + $0x98] sm:$0xf]
  %v84 = vld [vmem:[%s1 + $0x9c] sm:$0xf]
  %v85 = vld [vmem:[%s1 + $0xa0] sm:$0xf]
  %v86 = vld [vmem:[%s1 + $0xa4] sm:$0xf]
  %v87 = vld [vmem:[%s1 + $0xa8] sm:$0xf]
  %v88 = vld [vmem:[%s1 + $0xac] sm:$0xf]
  %v89 = vld [vmem:[%s1 + $0xb0] sm:$0xf]
  %v90 = vld [vmem:[%s1 + $0xb4] sm:$0xf]
  %v91 = vld [vmem:[%s1 + $0xb8] sm:$0xf]
  %v92 = vld [vmem:[%s1 + $0xbc] sm:$0xf]
  %v93 = vld [vmem:[%s1 + $0xc0] sm:$0xf]
  %v94 = vld [vmem:[%s1 + $0xc4] sm:$0xf]
  %v95 = vld [vmem:[%s1 + $0xc8] sm:$0xf]
  %v96 = vld [vmem:[%s1 + $0xcc] sm:$0xf]
  %v97 = vld [vmem:[%s1 + $0xd0] sm:$0xf]
  %v98 = vld [vmem:[%s1 + $0xd4] sm:$0xf]
  %v99 = vld [vmem:[%s1 + $0xd8] sm:$0xf]
  %v100 = vld [vmem:[%s1 + $0xdc] sm:$0xf]
  %v101 = vld [vmem:[%s1 + $0xe0] sm:$0xf]
  %v102 = vld [vmem:[%s1 + $0xe4] sm:$0xf]
  %v103 = vld [vmem:[%s1 + $0xe8] sm:$0xf]
  %v104 = vld [vmem:[%s1 + $0xec] sm:$0xf]
  %v105 = vld [vmem:[%s1 + $0xf0] sm:$0xf]
  %v106 = vld [vmem:[%s1 + $0xf4] sm:$0xf]
  %v107 = vld [vmem:[%s1 + $0xf8] sm:$0xf]
  %v108 = vld [vmem:[%s1 + $0xfc] sm:$0xf]
  %v109 = vld [vmem:[%s1 + $0x100] sm:$0xf]
  %v110 = vld [vmem:[%s1 + $0x104] sm:$0xf]
  %v111 = vld [vmem:[%s1 + $0x108] sm:$0xf]
  %v112 = vld [vmem:[%s1 + $0x10c] sm:$0xf]
  %v113 = vld [vmem:[%s1 + $0x110] sm:$0xf]
  %v114 = vld [vmem:[%s1 + $0x114] sm:$0xf]
  %v115 = vld [vmem:[%s1 + $0x118] sm:$0xf]
  %v116 = vld [vmem:[%s1 + $0x11c] sm:$0xf]
  %v117 = vld [vmem:[%s1 + $0x120] sm:$0xf]
  %v118 = vld [vmem:[%s1 + $0x124] sm:$0xf]
  %v119 = vld [vmem:[%s1 + $0x128] sm:$0xf]
  %v120 = vld [vmem:[%s1 + $0x12c] sm:$0xf]
  %v121 = vld [vmem:[%s1 + $0x130] sm:$0xf]
  %v122 = vld [vmem:[%s1 + $0x134] sm:$0xf]
  %v123 = vld [vmem:[%s1 + $0x138] sm:$0xf]
  %v124 = vld [vmem:[%s1 + $0x13c] sm:$0xf]
  %v125 = vld [vmem:[%s1 + $0x140] sm:$0xf]
  %v126 = vld [vmem:[%s1 + $0x144] sm:$0xf]
  %v127 = vld [vmem:[%s1 + $0x148] sm:$0xf]
  %v128 = vld [vmem:[%s1 + $0x14c] sm:$0xf]
  %v129 = vld [vmem:[%s1 + $0x150] sm:$0xf]
  %v130 = vld [vmem:[%s1 + $0x154] sm:$0xf]
  %v131 = vld [vmem:[%s1 + $0x158] sm:$0xf]
  %v132 = vld [vmem:[%s1 + $0x15c] sm:$0xf]
  %v133 = vld [vmem:[%s1 + $0x160] sm:$0xf]
  %v134 = vld [vmem:[%s1 + $0x164] sm:$0xf]
  %v135 = vld [vmem:[%s1 + $0x168] sm:$0xf]
  %v136 = vld [vmem:[%s1 + $0x16c] sm:$0xf]
  %v137 = vld [vmem:[%s1 + $0x170] sm:$0xf]
  %v138 = vld [vmem:[%s1 + $0x174] sm:$0xf]
  %v139 = vld [vmem:[%s1 + $0x178] sm:$0xf]
  %v140 = vld [vmem:[%s1 + $0x17c] sm:$0xf]
  %v141 = vld [vmem:[%s2] sm:$0x1]
  %v143 = vlaneseq
  %v144 = vshrl.u32 %v143, 7
  %v145 = vsub.s32 0, %v144
  %v146 = vrot.slane %v141, %v145
  %v244 = vunpack.c.l.b16 %v45
  %v245 = vunpack.c.l.b16 %v46
  %v246 = vunpack.c.l.b16 %v47
  %v247 = vunpack.c.l.b16 %v48
  %v248 = vunpack.c.l.b16 %v49
  %v249 = vunpack.c.l.b16 %v50
  %v250 = vunpack.c.l.b16 %v51
  %v251 = vunpack.c.l.b16 %v52
  %v252 = vunpack.c.l.b16 %v53
  %v253 = vunpack.c.l.b16 %v54
  %v254 = vunpack.c.l.b16 %v55
  %v255 = vunpack.c.l.b16 %v56
  %v256 = vunpack.c.l.b16 %v57
  %v257 = vunpack.c.l.b16 %v58
  %v258 = vunpack.c.l.b16 %v59
  %v259 = vunpack.c.l.b16 %v60
  %v260 = vunpack.c.l.b16 %v61
  %v261 = vunpack.c.l.b16 %v62
  %v262 = vunpack.c.l.b16 %v63
  %v263 = vunpack.c.l.b16 %v64
  %v264 = vunpack.c.l.b16 %v65
  %v265 = vunpack.c.l.b16 %v66
  %v266 = vunpack.c.l.b16 %v67
  %v267 = vunpack.c.l.b16 %v68
  %v268 = vunpack.c.l.b16 %v69
  %v269 = vunpack.c.l.b16 %v70
  %v270 = vunpack.c.l.b16 %v71
  %v271 = vunpack.c.l.b16 %v72
  %v272 = vunpack.c.l.b16 %v73
  %v273 = vunpack.c.l.b16 %v74
  %v274 = vunpack.c.l.b16 %v75
  %v275 = vunpack.c.l.b16 %v76
  %v276 = vunpack.c.l.b16 %v77
  %v277 = vunpack.c.l.b16 %v78
  %v278 = vunpack.c.l.b16 %v79
  %v279 = vunpack.c.l.b16 %v80
  %v280 = vunpack.c.l.b16 %v81
  %v281 = vunpack.c.l.b16 %v82
  %v282 = vunpack.c.l.b16 %v83
  %v283 = vunpack.c.l.b16 %v84
  %v284 = vunpack.c.l.b16 %v85
  %v285 = vunpack.c.l.b16 %v86
  %v286 = vunpack.c.l.b16 %v87
  %v287 = vunpack.c.l.b16 %v88
  %v288 = vunpack.c.l.b16 %v89
  %v289 = vunpack.c.l.b16 %v90
  %v290 = vunpack.c.l.b16 %v91
  %v291 = vunpack.c.l.b16 %v92
  %v292 = vunpack.c.l.b16 %v93
  %v293 = vunpack.c.l.b16 %v94
  %v294 = vunpack.c.l.b16 %v95
  %v295 = vunpack.c.l.b16 %v96
  %v296 = vunpack.c.l.b16 %v97
  %v297 = vunpack.c.l.b16 %v98
  %v298 = vunpack.c.l.b16 %v99
  %v299 = vunpack.c.l.b16 %v100
  %v300 = vunpack.c.l.b16 %v101
  %v301 = vunpack.c.l.b16 %v102
  %v302 = vunpack.c.l.b16 %v103
  %v303 = vunpack.c.l.b16 %v104
  %v304 = vunpack.c.l.b16 %v105
  %v305 = vunpack.c.l.b16 %v106
  %v306 = vunpack.c.l.b16 %v107
  %v307 = vunpack.c.l.b16 %v108
  %v308 = vunpack.c.l.b16 %v109
  %v309 = vunpack.c.l.b16 %v110
  %v310 = vunpack.c.l.b16 %v111
  %v311 = vunpack.c.l.b16 %v112
  %v312 = vunpack.c.l.b16 %v113
  %v313 = vunpack.c.l.b16 %v114
  %v314 = vunpack.c.l.b16 %v115
  %v315 = vunpack.c.l.b16 %v116
  %v316 = vunpack.c.l.b16 %v117
  %v317 = vunpack.c.l.b16 %v118
  %v318 = vunpack.c.l.b16 %v119
  %v319 = vunpack.c.l.b16 %v120
  %v320 = vunpack.c.l.b16 %v121
  %v321 = vunpack.c.l.b16 %v122
  %v322 = vunpack.c.l.b16 %v123
  %v323 = vunpack.c.l.b16 %v124
  %v324 = vunpack.c.l.b16 %v125
  %v325 = vunpack.c.l.b16 %v126
  %v326 = vunpack.c.l.b16 %v127
  %v327 = vunpack.c.l.b16 %v128
  %v328 = vunpack.c.l.b16 %v129
  %v329 = vunpack.c.l.b16 %v130
  %v330 = vunpack.c.l.b16 %v131
  %v331 = vunpack.c.l.b16 %v132
  %v332 = vunpack.c.l.b16 %v133
  %v333 = vunpack.c.l.b16 %v134
  %v334 = vunpack.c.l.b16 %v135
  %v335 = vunpack.c.l.b16 %v136
  %v336 = vunpack.c.l.b16 %v137
  %v337 = vunpack.c.l.b16 %v138
  %v338 = vunpack.c.l.b16 %v139
  %v339 = vunpack.c.l.b16 %v140
  %v340 = vpack.c.b16 %v245, %v244
  %v341 = vpack.c.b16 %v247, %v246
  %v342 = vpack.c.b16 %v249, %v248
  %v343 = vpack.c.b16 %v251, %v250
  %v344 = vpack.c.b16 %v253, %v252
  %v345 = vpack.c.b16 %v255, %v254
  %v346 = vpack.c.b16 %v257, %v256
  %v347 = vpack.c.b16 %v259, %v258
  %v348 = vpack.c.b16 %v261, %v260
  %v349 = vpack.c.b16 %v263, %v262
  %v350 = vpack.c.b16 %v265, %v264
  %v351 = vpack.c.b16 %v267, %v266
  %v352 = vpack.c.b16 %v269, %v268
  %v353 = vpack.c.b16 %v271, %v270
  %v354 = vpack.c.b16 %v273, %v272
  %v355 = vpack.c.b16 %v275, %v274
  %v356 = vpack.c.b16 %v277, %v276
  %v357 = vpack.c.b16 %v279, %v278
  %v358 = vpack.c.b16 %v281, %v280
  %v359 = vpack.c.b16 %v283, %v282
  %v360 = vpack.c.b16 %v285, %v284
  %v361 = vpack.c.b16 %v287, %v286
  %v362 = vpack.c.b16 %v289, %v288
  %v363 = vpack.c.b16 %v291, %v290
  %v364 = vpack.c.b16 %v293, %v292
  %v365 = vpack.c.b16 %v295, %v294
  %v366 = vpack.c.b16 %v297, %v296
  %v367 = vpack.c.b16 %v299, %v298
  %v368 = vpack.c.b16 %v301, %v300
  %v369 = vpack.c.b16 %v303, %v302
  %v370 = vpack.c.b16 %v305, %v304
  %v371 = vpack.c.b16 %v307, %v306
  %v372 = vpack.c.b16 %v309, %v308
  %v373 = vpack.c.b16 %v311, %v310
  %v374 = vpack.c.b16 %v313, %v312
  %v375 = vpack.c.b16 %v315, %v314
  %v376 = vpack.c.b16 %v317, %v316
  %v377 = vpack.c.b16 %v319, %v318
  %v378 = vpack.c.b16 %v321, %v320
  %v379 = vpack.c.b16 %v323, %v322
  %v380 = vpack.c.b16 %v325, %v324
  %v381 = vpack.c.b16 %v327, %v326
  %v382 = vpack.c.b16 %v329, %v328
  %v383 = vpack.c.b16 %v331, %v330
  %v384 = vpack.c.b16 %v333, %v332
  %v385 = vpack.c.b16 %v335, %v334
  %v386 = vpack.c.b16 %v337, %v336
  %v387 = vpack.c.b16 %v339, %v338
  %436 = vmatprep.subr.bf16.mxu0 0
  %437 = vmatpush1.bf16.msra.mxu0 %v340
  %438 = vmatprep.subr.bf16.mxu0 0
  %439 = vmatpush1.bf16.msra.mxu0 %v341
  %440 = vmatprep.subr.bf16.mxu0 0
  %441 = vmatpush1.bf16.msra.mxu0 %v342
  %442 = vmatprep.subr.bf16.mxu0 0
  %443 = vmatpush1.bf16.msra.mxu0 %v343
  %444 = vmatprep.subr.bf16.mxu0 0
  %445 = vmatpush1.bf16.msra.mxu0 %v344
  %446 = vmatprep.subr.bf16.mxu0 0
  %447 = vmatpush1.bf16.msra.mxu0 %v345
  %448 = vmatprep.subr.bf16.mxu0 0
  %449 = vmatpush1.bf16.msra.mxu0 %v346
  %450 = vmatprep.subr.bf16.mxu0 0
  %451 = vmatpush1.bf16.msra.mxu0 %v347
  %452 = vmatprep.subr.bf16.mxu0 0
  %453 = vmatpush1.bf16.msra.mxu0 %v348
  %454 = vmatprep.subr.bf16.mxu0 0
  %455 = vmatpush1.bf16.msra.mxu0 %v349
  %456 = vmatprep.subr.bf16.mxu0 0
  %457 = vmatpush1.bf16.msra.mxu0 %v350
  %458 = vmatprep.subr.bf16.mxu0 0
  %459 = vmatpush1.bf16.msra.mxu0 %v351
  %460 = vmatprep.subr.bf16.mxu0 0
  %461 = vmatpush1.bf16.msra.mxu0 %v352
  %462 = vmatprep.subr.bf16.mxu0 0
  %463 = vmatpush1.bf16.msra.mxu0 %v353
  %464 = vmatprep.subr.bf16.mxu0 0
  %465 = vmatpush1.bf16.msra.mxu0 %v354
  %466 = vmatprep.subr.bf16.mxu0 0
  %467 = vmatpush1.bf16.msra.mxu0 %v355
  %468 = vmatprep.mubr.bf16.mxu0 %v40
  %469 = vmatmul.mubr.bf16.gmra.mrb[0].mxu0 %v39
  %v470 = vpop.f32.mrb[0].mxu0
  %v471 = vadd.f32 %v146, %v470
  %v472 = vpop.f32.mrb[0].mxu0
  %v473 = vpop.f32.mrb[0].mxu0
  %v474 = vadd.f32 %v146, %v473
  %v475 = vpop.f32.mrb[0].mxu0
  %476 = vdwg.mxu0
  %477 = vmatprep.subr.bf16.mxu0 0
  %478 = vmatpush1.bf16.msra.mxu0 %v356
  %479 = vmatprep.subr.bf16.mxu0 0
  %480 = vmatpush1.bf16.msra.mxu0 %v357
  %481 = vmatprep.subr.bf16.mxu0 0
  %482 = vmatpush1.bf16.msra.mxu0 %v358
  %483 = vmatprep.subr.bf16.mxu0 0
  %484 = vmatpush1.bf16.msra.mxu0 %v359
  %485 = vmatprep.subr.bf16.mxu0 0
  %486 = vmatpush1.bf16.msra.mxu0 %v360
  %487 = vmatprep.subr.bf16.mxu0 0
  %488 = vmatpush1.bf16.msra.mxu0 %v361
  %489 = vmatprep.subr.bf16.mxu0 0
  %490 = vmatpush1.bf16.msra.mxu0 %v362
  %491 = vmatprep.subr.bf16.mxu0 0
  %492 = vmatpush1.bf16.msra.mxu0 %v363
  %493 = vmatprep.subr.bf16.mxu0 0
  %494 = vmatpush1.bf16.msra.mxu0 %v364
  %495 = vmatprep.subr.bf16.mxu0 0
  %496 = vmatpush1.bf16.msra.mxu0 %v365
  %497 = vmatprep.subr.bf16.mxu0 0
  %498 = vmatpush1.bf16.msra.mxu0 %v366
  %499 = vmatprep.subr.bf16.mxu0 0
  %500 = vmatpush1.bf16.msra.mxu0 %v367
  %501 = vmatprep.subr.bf16.mxu0 0
  %502 = vmatpush1.bf16.msra.mxu0 %v368
  %503 = vmatprep.subr.bf16.mxu0 0
  %504 = vmatpush1.bf16.msra.mxu0 %v369
  %505 = vmatprep.subr.bf16.mxu0 0
  %506 = vmatpush1.bf16.msra.mxu0 %v370
  %507 = vmatprep.subr.bf16.mxu0 0
  %508 = vmatpush1.bf16.msra.mxu0 %v371
  %509 = vmatprep.mubr.bf16.mxu0 %v42
  %510 = vmatmul.mubr.bf16.gmra.mrb[0].mxu0 %v41
  %v511 = vpop.f32.mrb[0].mxu0
  %v512 = vadd.f32 %v471, %v511
  %v513 = vpop.f32.mrb[0].mxu0
  %v514 = vpop.f32.mrb[0].mxu0
  %v515 = vadd.f32 %v474, %v514
  %v516 = vpop.f32.mrb[0].mxu0
  %517 = vdwg.mxu0
  %518 = vmatprep.subr.bf16.mxu0 0
  %519 = vmatpush1.bf16.msra.mxu0 %v372
  %520 = vmatprep.subr.bf16.mxu0 0
  %521 = vmatpush1.bf16.msra.mxu0 %v373
  %522 = vmatprep.subr.bf16.mxu0 0
  %523 = vmatpush1.bf16.msra.mxu0 %v374
  %524 = vmatprep.subr.bf16.mxu0 0
  %525 = vmatpush1.bf16.msra.mxu0 %v375
  %526 = vmatprep.subr.bf16.mxu0 0
  %527 = vmatpush1.bf16.msra.mxu0 %v376
  %528 = vmatprep.subr.bf16.mxu0 0
  %529 = vmatpush1.bf16.msra.mxu0 %v377
  %530 = vmatprep.subr.bf16.mxu0 0
  %531 = vmatpush1.bf16.msra.mxu0 %v378
  %532 = vmatprep.subr.bf16.mxu0 0
  %533 = vmatpush1.bf16.msra.mxu0 %v379
  %534 = vmatprep.subr.bf16.mxu0 0
  %535 = vmatpush1.bf16.msra.mxu0 %v380
  %536 = vmatprep.subr.bf16.mxu0 0
  %537 = vmatpush1.bf16.msra.mxu0 %v381
  %538 = vmatprep.subr.bf16.mxu0 0
  %539 = vmatpush1.bf16.msra.mxu0 %v382
  %540 = vmatprep.subr.bf16.mxu0 0
  %541 = vmatpush1.bf16.msra.mxu0 %v383
  %542 = vmatprep.subr.bf16.mxu0 0
  %543 = vmatpush1.bf16.msra.mxu0 %v384
  %544 = vmatprep.subr.bf16.mxu0 0
  %545 = vmatpush1.bf16.msra.mxu0 %v385
  %546 = vmatprep.subr.bf16.mxu0 0
  %547 = vmatpush1.bf16.msra.mxu0 %v386
  %548 = vmatprep.subr.bf16.mxu0 0
  %549 = vmatpush1.bf16.msra.mxu0 %v387
  %550 = vmatprep.mubr.bf16.mxu0 %v44
  %551 = vmatmul.mubr.bf16.gmra.mrb[0].mxu0 %v43
  %v552 = vpop.f32.mrb[0].mxu0
  %v553 = vadd.f32 %v512, %v552
  %v554 = vpop.f32.mrb[0].mxu0
  %v555 = vpop.f32.mrb[0].mxu0
  %v556 = vadd.f32 %v515, %v555
  %v557 = vpop.f32.mrb[0].mxu0
  %558 = vdwg.mxu0
  %v559 = vmax.f32 %v553, 0.0
  %v560 = vmax.f32 %v556, 0.0
  %v561 = vld [vmem:[%s3] sm:$0xff]
  %vm562 = vcmask 80896
  %v564 = vsel %vm562, %v561, 0
  %vm566 = vcmask 1041408
  %v568 = vsel %vm566, %v560, 0
  %570 = vmatprep.subr.mxu0 0.0
  %571 = vmatpush1.msra.mxu0 %v559
  %572 = vmatprep.subr.mxu0 0.0
  %573 = vmatpush1.msra.mxu0 %v568
  %574 = vmatprep.subr.mxu0 0.0
  %575 = vmatpush1.msra.mxu0 0.0
  %576 = vmatprep.subr.mxu0 0.0
  %577 = vmatpush1.msra.mxu0 0.0
  %578 = vmatprep.subr.mxu0 0.0
  %579 = vmatpush1.msra.mxu0 0.0
  %580 = vmatprep.subr.mxu0 0.0
  %581 = vmatpush1.msra.mxu0 0.0
  %582 = vmatprep.subr.mxu0 0.0
  %583 = vmatpush1.msra.mxu0 0.0
  %584 = vmatprep.subr.mxu0 0.0
  %585 = vmatpush1.msra.mxu0 0.0
  %586 = vmatprep.subr.mxu0 0.0
  %587 = vmatpush1.msra.mxu0 0.0
  %588 = vmatprep.subr.mxu0 0.0
  %589 = vmatpush1.msra.mxu0 0.0
  %590 = vmatprep.subr.mxu0 0.0
  %591 = vmatpush1.msra.mxu0 0.0
  %592 = vmatprep.subr.mxu0 0.0
  %593 = vmatpush1.msra.mxu0 0.0
  %594 = vmatprep.subr.mxu0 0.0
  %595 = vmatpush1.msra.mxu0 0.0
  %596 = vmatprep.subr.mxu0 0.0
  %597 = vmatpush1.msra.mxu0 0.0
  %598 = vmatprep.subr.mxu0 0.0
  %599 = vmatpush1.msra.mxu0 0.0
  %600 = vmatprep.subr.mxu0 0.0
  %601 = vmatpush1.msra.mxu0 0.0
  %602 = vmatprep.subr.mxu0 0.0
  %603 = vmatpush1.msra.mxu0 0.0
  %604 = vmatprep.subr.mxu0 0.0
  %605 = vmatpush1.msra.mxu0 0.0
  %606 = vmatprep.subr.mxu0 0.0
  %607 = vmatpush1.msra.mxu0 0.0
  %608 = vmatprep.subr.mxu0 0.0
  %609 = vmatpush1.msra.mxu0 0.0
  %610 = vmatprep.subr.mxu0 0.0
  %611 = vmatpush1.msra.mxu0 0.0
  %612 = vmatprep.subr.mxu0 0.0
  %613 = vmatpush1.msra.mxu0 0.0
  %614 = vmatprep.subr.mxu0 0.0
  %615 = vmatpush1.msra.mxu0 0.0
  %616 = vmatprep.subr.mxu0 0.0
  %617 = vmatpush1.msra.mxu0 0.0
  %618 = vmatprep.subr.mxu0 0.0
  %619 = vmatpush1.msra.mxu0 0.0
  %620 = vmatprep.subr.mxu0 0.0
  %621 = vmatpush1.msra.mxu0 0.0
  %622 = vmatprep.subr.mxu0 0.0
  %623 = vmatpush1.msra.mxu0 0.0
  %624 = vmatprep.subr.mxu0 0.0
  %625 = vmatpush1.msra.mxu0 0.0
  %626 = vmatprep.subr.mxu0 0.0
  %627 = vmatpush1.msra.mxu0 0.0
  %628 = vmatprep.subr.mxu0 0.0
  %629 = vmatpush1.msra.mxu0 0.0
  %630 = vmatprep.subr.mxu0 0.0
  %631 = vmatpush1.msra.mxu0 0.0
  %632 = vmatprep.subr.mxu0 0.0
  %633 = vmatpush1.msra.mxu0 0.0
  %634 = vmatprep.mubr.f32.mxu0 0.0
  %635 = vmatmul.mubr.f32.gmra.mrb[0].mxu0 %v564
  %v636 = vpop.f32.mrb[0].mxu0
  %v637 = vadd.f32 0.0, %v636
  %v638 = vpop.f32.mrb[0].mxu0
  %639 = vdwg.mxu0
  %v640 = vmul.f32 %v637, 0.2
  %641 = vst [vmem:[%s6] sm:$0xff] %v640
  %v642 = vld [vmem:[%s4] sm:$0x1]
  %v644 = vlaneseq
  %v645 = vshrl.u32 %v644, 7
  %v646 = vsub.s32 0, %v645
  %v647 = vrot.slane %v642, %v646
  %v649 = vmul.f32 %v640, %v647
  %650 = vadd.xlane.f32.xlu0 %v649
  %v651 = vpop.xlane.xlu0 %650
  %s652 = sld [smem:[#allocation2]]
  %v653 = vstv %s652
  %v654 = vadd.f32 %v651, %v653
  %655 = vst [vmem:[%s7] sm:$0xff] %v654
  // Predicated region
  $region26: #{skeleton_detector_forward.1} parent=0 // pred_check
    _
  $region27: #{skeleton_detector_forward.1} parent=0 // pred_check_branch
    %657 = sbr.rel (0) target = $region29
  $region28: #{skeleton_detector_forward.1} parent=0 // pred_region
    _
  $region29: #{skeleton_detector_forward.1} parent=0 // pred_fallthru
    _
  // Predicated region
  $region30: #{skeleton_detector_forward.1} parent=0 // pred_check
    _
  $region31: #{skeleton_detector_forward.1} parent=0 // pred_check_branch
    %659 = sbr.rel (0) target = $region33
  $region32: #{skeleton_detector_forward.1} parent=0 // pred_region
    _
  $region33: #{skeleton_detector_forward.1} parent=0 // pred_fallthru
    _
  // Predicated region
  $region34: #{skeleton_detector_forward.1} parent=0 // pred_check
    _
  $region35: #{skeleton_detector_forward.1} parent=0 // pred_check_branch
    %661 = sbr.rel (0) target = $region37
  $region36: #{skeleton_detector_forward.1} parent=0 // pred_region
    _
  $region37: #{skeleton_detector_forward.1} parent=0 // pred_fallthru
    _
  // Predicated region
  $region38: #{skeleton_detector_forward.1} parent=0 // pred_check
    _
  $region39: #{skeleton_detector_forward.1} parent=0 // pred_check_branch
    %663 = sbr.rel (0) target = $region41
  $region40: #{skeleton_detector_forward.1} parent=0 // pred_region
    _
  $region41: #{skeleton_detector_forward.1} parent=0 // pred_fallthru
    _

</llo_original>
